<compile_context>
chip_gen: v6e
topology: v6e:2x2x1
jax: 0.10.0
libtpu: 0.0.40
codegen_flags: <defaults>
</compile_context>

<pallas_src>
import math

import jax
import jax.numpy as jnp
from jax import lax
from jax.experimental import pallas as pl
from jax.experimental.pallas import tpu as pltpu


def _round_up(x, m):
    return ((x + m - 1) // m) * m


def _default_bf16_tanh():
    """bf16 VPU/EUP path exists on v6e / v7x; keep f32 transcendentals elsewhere."""
    try:
        kind = jax.devices()[0].device_kind.lower()
    except Exception:
        return False
    return ("v6" in kind) or ("v7" in kind) or ("7x" in kind)


# ----------------------------------------------------------------------------
# Kernel: one batch tile of the full forward pass, feature-major internally.
#   x_ref  : [Bt, D]  (natural layout, any float dtype; cast to bf16 in-kernel)
#   w0_ref : [H0, D ] bf16        b0_ref : [H0, 1] f32
#   w1_ref : [H1, H0] bf16        b1_ref : [H1, 1] f32
#   w2_ref : [A,  H1] bf16        b2_ref : [A,  1] f32
#   out_ref: [A,  Bt] f32         (softmax over the action/sublane axis)
# ----------------------------------------------------------------------------
def _make_kernel(bf16_tanh: bool):
    act_dtype = jnp.bfloat16 if bf16_tanh else jnp.float32

    def kernel(x_ref, w0_ref, b0_ref, w1_ref, b1_ref, w2_ref, b2_ref, out_ref):
        xb = x_ref[...].astype(jnp.bfloat16)                      # [Bt, D]

        # shared layer: h0 = tanh(W0 @ x^T + b0)  -> [H0, Bt]
        # (contract x's lane dim; MXU bf16 x bf16 -> f32 accumulation)
        z0 = lax.dot_general(
            w0_ref[...], xb,
            dimension_numbers=(((1,), (1,)), ((), ())),
            preferred_element_type=jnp.float32) + b0_ref[...]
        h0 = jnp.tanh(z0.astype(act_dtype)).astype(jnp.bfloat16)

        # actor hidden layer: h1 = tanh(W1 @ h0 + b1)  -> [H1, Bt]
        z1 = jnp.dot(w1_ref[...], h0,
                     preferred_element_type=jnp.float32) + b1_ref[...]
        h1 = jnp.tanh(z1.astype(act_dtype)).astype(jnp.bfloat16)

        # output layer: logits = W2 @ h1 + b2  -> [A, Bt]
        logits = jnp.dot(w2_ref[...], h1,
                         preferred_element_type=jnp.float32) + b2_ref[...]

        # Numerically stable softmax over the action axis (axis 0 = sublanes,
        # cheap XLU reduce). Exact division so every row sums to 1 in f32.
        m = jnp.max(logits, axis=0, keepdims=True)                # [1, Bt]
        e = jnp.exp(logits - m)                                   # [A, Bt]
        s = jnp.sum(e, axis=0, keepdims=True)                     # [1, Bt]
        out_ref[...] = (e / s).astype(out_ref.dtype)

    return kernel


def discrete_policy_forward(x, w0, b0, w1, b1, w2, b2, *,
                            b_tile=8192, bf16_tanh=None):
    """x: [B, D] float; weights in PyTorch [out, in] layout; biases [out, 1].

    Returns action probabilities, shape [B, A], float32.
    """
    B, D = x.shape
    H0 = w0.shape[0]
    H1 = w1.shape[0]
    A = w2.shape[0]

    if bf16_tanh is None:
        bf16_tanh = _default_bf16_tanh()

    # 128-align the batch (no-op when already aligned; the old full
    # pad+transpose+cast pre-pass over x is gone).
    b_pad = _round_up(B, 128)

    # Clamp the tile so large batches always give >= 2 grid steps (v7x megacore)
    # and never exceed the aligned batch. Default 8192 keeps double-buffered
    # VMEM ~5 MiB (well under the v5e 16 MiB scoped default).
    half = _round_up(pl.cdiv(b_pad, 2), 128)
    b_tile = max(128, min(b_tile, half, b_pad))
    n_tiles = pl.cdiv(b_pad, b_tile)

    if b_pad != B:
        x = jnp.pad(x, ((0, b_pad - B), (0, 0)))

    w0b = w0.astype(jnp.bfloat16)
    w1b = w1.astype(jnp.bfloat16)
    w2b = w2.astype(jnp.bfloat16)

    const = lambda i: (0, 0)   # weights/biases: same block every step -> VMEM-resident

    out_t = pl.pallas_call(
        _make_kernel(bf16_tanh),
        out_shape=jax.ShapeDtypeStruct((A, n_tiles * b_tile), jnp.float32),
        grid=(n_tiles,),
        in_specs=[
            pl.BlockSpec((b_tile, D), lambda i: (i, 0)),   # x streamed over batch
            pl.BlockSpec((H0, D), const),
            pl.BlockSpec((H0, 1), const),
            pl.BlockSpec((H1, H0), const),
            pl.BlockSpec((H1, 1), const),
            pl.BlockSpec((A, H1), const),
            pl.BlockSpec((A, 1), const),
        ],
        out_specs=pl.BlockSpec((A, b_tile), lambda i: (0, i)),
        compiler_params=pltpu.CompilerParams(
            dimension_semantics=("parallel",)),
    )(x, w0b, b0, w1b, b1, w2b, b2)

    # lane-dense [A, *] -> batch-major [B, A]
    return out_t[:, :B].T


# ----------------------------------------------------------------------------
# Deterministic parameter init mimicking nn.Linear's default
# uniform(-1/sqrt(fan_in), 1/sqrt(fan_in)). Weights in PyTorch [out, in]
# layout, biases as [out, 1] for lane-broadcast inside the kernel.
# ----------------------------------------------------------------------------
def init_linear(key, fan_in, fan_out):
    kw, kb = jax.random.split(key)
    bound = 1.0 / math.sqrt(fan_in)
    w = jax.random.uniform(kw, (fan_out, fan_in), jnp.float32, -bound, bound)
    b = jax.random.uniform(kb, (fan_out, 1), jnp.float32, -bound, bound)
    return w, b


def reference_forward(x, w0, b0, w1, b1, w2, b2):
    """Plain-JAX reference with the same bf16 matmul quantization as the kernel."""
    bf = lambda a: a.astype(jnp.bfloat16).astype(jnp.float32)
    h = jnp.tanh(bf(x) @ bf(w0).T + b0.T)
    h = jnp.tanh(bf(h) @ bf(w1).T + b1.T)
    logits = bf(h) @ bf(w2).T + b2.T
    return jax.nn.softmax(logits, axis=-1)


if __name__ == "__main__":
    # Module hyperparameters (DiscretePolicyParams equivalent):
    #   state_dimension  = (4, 16)  -> flattened input dim = 64
    #   actor_layers     = (32, 32)
    #   actor_activation = "tanh"
    #   num_shared_layers = 1  (param sharing on: first hidden layer is shared)
    #   action_space     = 6
    # TODO(synk): Categorical sampling / act() / buffer update are host-side and
    # not part of the forward pass; only forward() (action probabilities) is fused.
    state_dim = 4 * 16
    hidden = (32, 32)
    action_space = 6
    batch = 2

    key = jax.random.PRNGKey(0)
    kx, k0, k1, k2 = jax.random.split(key, 4)

    x = jax.random.normal(kx, (batch, state_dim), jnp.float32)
    w0, b0 = init_linear(k0, state_dim, hidden[0])      # shared Linear 64 -> 32 (+tanh)
    w1, b1 = init_linear(k1, hidden[0], hidden[1])      # actor  Linear 32 -> 32 (+tanh)
    w2, b2 = init_linear(k2, hidden[1], action_space)   # output Linear 32 -> 6 (+softmax)

    probs = jax.block_until_ready(
        discrete_policy_forward(x, w0, b0, w1, b1, w2, b2))
    ref = reference_forward(x, w0, b0, w1, b1, w2, b2)
    assert probs.shape == (batch, action_space)
    assert jnp.allclose(probs, ref, atol=5e-3, rtol=5e-2)
    assert jnp.allclose(jnp.sum(probs, axis=-1), 1.0, atol=1e-4)

    # padded, multi-tile path (B not a multiple of 128, small explicit tile)
    batch2 = 300
    x2 = jax.random.normal(jax.random.PRNGKey(1), (batch2, state_dim), jnp.float32)
    probs2 = jax.block_until_ready(
        discrete_policy_forward(x2, w0, b0, w1, b1, w2, b2, b_tile=128))
    ref2 = reference_forward(x2, w0, b0, w1, b1, w2, b2)
    assert probs2.shape == (batch2, action_space)
    assert jnp.allclose(probs2, ref2, atol=5e-3, rtol=5e-2)
    assert jnp.allclose(jnp.sum(probs2, axis=-1), 1.0, atol=1e-4)

    # aligned batch, default tile -> no padding pass, >= 2 grid steps
    batch3 = 512
    x3 = jax.random.normal(jax.random.PRNGKey(2), (batch3, state_dim), jnp.float32)
    probs3 = jax.block_until_ready(
        discrete_policy_forward(x3, w0, b0, w1, b1, w2, b2))
    ref3 = reference_forward(x3, w0, b0, w1, b1, w2, b2)
    assert probs3.shape == (batch3, action_space)
    assert jnp.allclose(probs3, ref3, atol=5e-3, rtol=5e-2)
    assert jnp.allclose(jnp.sum(probs3, axis=-1), 1.0, atol=1e-4)

    print("KERNEL_OK")
</pallas_src>

<mosaic_0001>
module attributes {stable_mosaic.version = 11 : i64} {
  func.func @kernel(%arg0: i32, %arg1: memref<128x64xf32, #tpu.memory_space<vmem>>, %arg2: memref<32x64xbf16, #tpu.memory_space<vmem>>, %arg3: memref<32x1xf32, #tpu.memory_space<vmem>>, %arg4: memref<32x32xbf16, #tpu.memory_space<vmem>>, %arg5: memref<32x1xf32, #tpu.memory_space<vmem>>, %arg6: memref<6x32xbf16, #tpu.memory_space<vmem>>, %arg7: memref<6x1xf32, #tpu.memory_space<vmem>>, %arg8: memref<6x128xf32, #tpu.memory_space<vmem>>) attributes {dimension_semantics = [#tpu.dimension_semantics<parallel>], iteration_bounds = array<i64: 1>, scalar_prefetch = 0 : i64, scratch_operands = 0 : i64, tpu.core_type = #tpu.core_type<tc>, window_params = [{transform_indices = @transform_0, window_bounds = array<i64: 128, 64>}, {pipeline_mode = #tpu.pipeline_mode<synchronous>, transform_indices = @transform_1, window_bounds = array<i64: 32, 64>}, {pipeline_mode = #tpu.pipeline_mode<synchronous>, transform_indices = @transform_2, window_bounds = array<i64: 32, 1>}, {pipeline_mode = #tpu.pipeline_mode<synchronous>, transform_indices = @transform_3, window_bounds = array<i64: 32, 32>}, {pipeline_mode = #tpu.pipeline_mode<synchronous>, transform_indices = @transform_4, window_bounds = array<i64: 32, 1>}, {pipeline_mode = #tpu.pipeline_mode<synchronous>, transform_indices = @transform_5, window_bounds = array<i64: 6, 32>}, {pipeline_mode = #tpu.pipeline_mode<synchronous>, transform_indices = @transform_6, window_bounds = array<i64: 6, 1>}, {transform_indices = @transform_7, window_bounds = array<i64: 6, 128>}]} {
    %c0 = arith.constant 0 : index
    %c0_0 = arith.constant 0 : index
    %0 = vector.load %arg1[%c0, %c0_0] : memref<128x64xf32, #tpu.memory_space<vmem>>, vector<128x64xf32>
    %1 = arith.truncf %0 : vector<128x64xf32> to vector<128x64xbf16>
    %c0_1 = arith.constant 0 : index
    %c0_2 = arith.constant 0 : index
    %2 = vector.load %arg2[%c0_1, %c0_2] : memref<32x64xbf16, #tpu.memory_space<vmem>>, vector<32x64xbf16>
    %cst = arith.constant dense<0.000000e+00> : vector<32x128xf32>
    %3 = tpu.matmul %2, %1, %cst {dimension_numbers = #tpu.dot_dimension_numbers<[1], [1], [0], [0], [0, 0, 1, 0], [], []>} : vector<32x64xbf16>, vector<128x64xbf16>, vector<32x128xf32> -> vector<32x128xf32>
    %c0_3 = arith.constant 0 : index
    %c0_4 = arith.constant 0 : index
    %4 = vector.load %arg3[%c0_3, %c0_4] : memref<32x1xf32, #tpu.memory_space<vmem>>, vector<32x1xf32>
    %5 = vector.broadcast %4 : vector<32x1xf32> to vector<32x128xf32>
    %6 = arith.addf %3, %5 : vector<32x128xf32>
    %7 = math.tanh %6 : vector<32x128xf32>
    %8 = arith.truncf %7 : vector<32x128xf32> to vector<32x128xbf16>
    %c0_5 = arith.constant 0 : index
    %c0_6 = arith.constant 0 : index
    %9 = vector.load %arg4[%c0_5, %c0_6] : memref<32x32xbf16, #tpu.memory_space<vmem>>, vector<32x32xbf16>
    %cst_7 = arith.constant dense<0.000000e+00> : vector<32x128xf32>
    %10 = tpu.matmul %9, %8, %cst_7 {dimension_numbers = #tpu.dot_dimension_numbers<[1], [0], [0], [1], [0, 0, 1, 1], [], []>} : vector<32x32xbf16>, vector<32x128xbf16>, vector<32x128xf32> -> vector<32x128xf32>
    %c0_8 = arith.constant 0 : index
    %c0_9 = arith.constant 0 : index
    %11 = vector.load %arg5[%c0_8, %c0_9] : memref<32x1xf32, #tpu.memory_space<vmem>>, vector<32x1xf32>
    %12 = vector.broadcast %11 : vector<32x1xf32> to vector<32x128xf32>
    %13 = arith.addf %10, %12 : vector<32x128xf32>
    %14 = math.tanh %13 : vector<32x128xf32>
    %15 = arith.truncf %14 : vector<32x128xf32> to vector<32x128xbf16>
    %c0_10 = arith.constant 0 : index
    %c0_11 = arith.constant 0 : index
    %16 = vector.load %arg6[%c0_10, %c0_11] : memref<6x32xbf16, #tpu.memory_space<vmem>>, vector<6x32xbf16>
    %cst_12 = arith.constant dense<0.000000e+00> : vector<6x128xf32>
    %17 = tpu.matmul %16, %15, %cst_12 {dimension_numbers = #tpu.dot_dimension_numbers<[1], [0], [0], [1], [0, 0, 1, 1], [], []>} : vector<6x32xbf16>, vector<32x128xbf16>, vector<6x128xf32> -> vector<6x128xf32>
    %c0_13 = arith.constant 0 : index
    %c0_14 = arith.constant 0 : index
    %18 = vector.load %arg7[%c0_13, %c0_14] : memref<6x1xf32, #tpu.memory_space<vmem>>, vector<6x1xf32>
    %19 = vector.broadcast %18 : vector<6x1xf32> to vector<6x128xf32>
    %20 = arith.addf %17, %19 : vector<6x128xf32>
    %cst_15 = arith.constant dense<0xFF800000> : vector<128xf32>
    %21 = vector.multi_reduction <maximumf>, %20, %cst_15 [0] : vector<6x128xf32> to vector<128xf32>
    %22 = vector.shape_cast %21 : vector<128xf32> to vector<1x128xf32>
    %23 = vector.broadcast %22 : vector<1x128xf32> to vector<6x128xf32>
    %24 = arith.subf %20, %23 : vector<6x128xf32>
    %25 = math.exp %24 : vector<6x128xf32>
    %cst_16 = arith.constant dense<0.000000e+00> : vector<128xf32>
    %26 = vector.multi_reduction <add>, %25, %cst_16 [0] : vector<6x128xf32> to vector<128xf32>
    %27 = vector.shape_cast %26 : vector<128xf32> to vector<1x128xf32>
    %28 = vector.broadcast %27 : vector<1x128xf32> to vector<6x128xf32>
    %29 = arith.divf %25, %28 : vector<6x128xf32>
    %c0_17 = arith.constant 0 : index
    %c0_18 = arith.constant 0 : index
    %30 = vector.load %arg8[%c0_17, %c0_18] : memref<6x128xf32, #tpu.memory_space<vmem>>, vector<6x128xf32>
    tpu.vector_store %arg8[%c0_17, %c0_18], %29 {strides = array<i32>} : memref<6x128xf32, #tpu.memory_space<vmem>>, vector<6x128xf32>,
    return
  }
  func.func @transform_0(%arg0: i32) -> (i32, i32) {
    %c0_i32 = arith.constant 0 : i32
    %c0_i32_0 = arith.constant 0 : i32
    return %arg0, %c0_i32 : i32, i32
  }
  func.func @transform_1(%arg0: i32) -> (i32, i32) {
    %c0_i32 = arith.constant 0 : i32
    %c0_i32_0 = arith.constant 0 : i32
    %c0_i32_1 = arith.constant 0 : i32
    return %c0_i32, %c0_i32_0 : i32, i32
  }
  func.func @transform_2(%arg0: i32) -> (i32, i32) {
    %c0_i32 = arith.constant 0 : i32
    %c0_i32_0 = arith.constant 0 : i32
    %c0_i32_1 = arith.constant 0 : i32
    return %c0_i32, %c0_i32_0 : i32, i32
  }
  func.func @transform_3(%arg0: i32) -> (i32, i32) {
    %c0_i32 = arith.constant 0 : i32
    %c0_i32_0 = arith.constant 0 : i32
    %c0_i32_1 = arith.constant 0 : i32
    return %c0_i32, %c0_i32_0 : i32, i32
  }
  func.func @transform_4(%arg0: i32) -> (i32, i32) {
    %c0_i32 = arith.constant 0 : i32
    %c0_i32_0 = arith.constant 0 : i32
    %c0_i32_1 = arith.constant 0 : i32
    return %c0_i32, %c0_i32_0 : i32, i32
  }
  func.func @transform_5(%arg0: i32) -> (i32, i32) {
    %c0_i32 = arith.constant 0 : i32
    %c0_i32_0 = arith.constant 0 : i32
    %c0_i32_1 = arith.constant 0 : i32
    return %c0_i32, %c0_i32_0 : i32, i32
  }
  func.func @transform_6(%arg0: i32) -> (i32, i32) {
    %c0_i32 = arith.constant 0 : i32
    %c0_i32_0 = arith.constant 0 : i32
    %c0_i32_1 = arith.constant 0 : i32
    return %c0_i32, %c0_i32_0 : i32, i32
  }
  func.func @transform_7(%arg0: i32) -> (i32, i32) {
    %c0_i32 = arith.constant 0 : i32
    %c0_i32_0 = arith.constant 0 : i32
    return %c0_i32, %arg0 : i32, i32
  }
}

</mosaic_0001>

<llo_original>
// kernel: tpu_custom_call.1
$region0: #{tpu_custom_call.1}
  #allocation0 [shape = 'u32[]', space=smem, size = 0x4, offset = 0x4, fixed_abs, tag = 'smem constant byte address 0x4 - core index']
  #allocation1 [shape = 'u32[144,128]{1,0:T(1,128)}', space=vmem, size = 0x12000, scoped, tag = 'internal scratch']
  %s0 = inlined_call_operand.vmem [shape: f32[128,64], index: 0, kind: input, shape index: {}]
  %s1 = inlined_call_operand.vmem [shape: bf16[32,64], index: 1, kind: input, shape index: {}]
  %s2 = inlined_call_operand.vmem [shape: f32[32,1], index: 2, kind: input, shape index: {}]
  %s3 = inlined_call_operand.vmem [shape: bf16[32,32], index: 3, kind: input, shape index: {}]
  %s4 = inlined_call_operand.vmem [shape: f32[32,1], index: 4, kind: input, shape index: {}]
  %s5 = inlined_call_operand.vmem [shape: bf16[6,32], index: 5, kind: input, shape index: {}]
  %s6 = inlined_call_operand.vmem [shape: f32[6,1], index: 6, kind: input, shape index: {}]
  %s7 = inlined_call_operand.hbm [shape: f32[6,128], index: 7, kind: output, shape index: {}]
  %s8 = sld [smem:[#allocation0]]
  $region38: #{tpu_custom_call.1} parent=0
    _
  %s10 = ssub.s32 1, %s8
  %s11 = scalar_select 0, %s10, %s8
  $region1: #{tpu_custom_call.1} parent=0
    #allocation2 [shape = 'u8[4096]{0}', space=vmem, size = 0x1000, scoped, tag = 'output window, operand 0, single buffered']
    #allocation3 [shape = 's32[1]{0}', space=sflag, size = 0x4, scoped, tag = 'scoped memory for tpu_custom_call.1']
    %12 = vsyncpa [#allocation3], 0
    // Predicated region
    $region2: #{tpu_custom_call.1} parent=1 // pred_check
      _
    $region3: #{tpu_custom_call.1} parent=1 // pred_check_branch
      %14 = sbr.rel (0) target = $region5
    $region4: #{tpu_custom_call.1} parent=1 // pred_region
      _
    $region5: #{tpu_custom_call.1} parent=1 // pred_fallthru
      _
    // Predicated region
    $region6: #{tpu_custom_call.1} parent=1 // pred_check
      _
    $region7: #{tpu_custom_call.1} parent=1 // pred_check_branch
      %16 = sbr.rel (0) target = $region9
    $region8: #{tpu_custom_call.1} parent=1 // pred_region
      _
    $region9: #{tpu_custom_call.1} parent=1 // pred_fallthru
      _
    // Predicated region
    $region10: #{tpu_custom_call.1} parent=1 // pred_check
      _
    $region11: #{tpu_custom_call.1} parent=1 // pred_check_branch
      %18 = sbr.rel (0) target = $region13
    $region12: #{tpu_custom_call.1} parent=1 // pred_region
      _
    $region13: #{tpu_custom_call.1} parent=1 // pred_fallthru
      _
    // Predicated region
    $region14: #{tpu_custom_call.1} parent=1 // pred_check
      _
    $region15: #{tpu_custom_call.1} parent=1 // pred_check_branch
      %20 = sbr.rel (0) target = $region17
    $region16: #{tpu_custom_call.1} parent=1 // pred_region
      _
    $region17: #{tpu_custom_call.1} parent=1 // pred_fallthru
      _
    // Predicated region
    $region18: #{tpu_custom_call.1} parent=1 // pred_check
      _
    $region19: #{tpu_custom_call.1} parent=1 // pred_check_branch
      %22 = sbr.rel (0) target = $region21
    $region20: #{tpu_custom_call.1} parent=1 // pred_region
      _
    $region21: #{tpu_custom_call.1} parent=1 // pred_fallthru
      _
    // Predicated region
    $region22: #{tpu_custom_call.1} parent=1 // pred_check
      _
    $region23: #{tpu_custom_call.1} parent=1 // pred_check_branch
      %24 = sbr.rel (0) target = $region25
    $region24: #{tpu_custom_call.1} parent=1 // pred_region
      _
    $region25: #{tpu_custom_call.1} parent=1 // pred_fallthru
      _
    // Predicated region
    $region26: #{tpu_custom_call.1} parent=1 // pred_check
      _
    $region27: #{tpu_custom_call.1} parent=1 // pred_check_branch
      %26 = sbr.rel (0) target = $region29
    $region28: #{tpu_custom_call.1} parent=1 // pred_region
      _
    $region29: #{tpu_custom_call.1} parent=1 // pred_fallthru
      _
    %v28 = vld [vmem:[%s0] sm:$0xff]
    %v29 = vld [vmem:[%s0 + $0x8] sm:$0xff]
    %v30 = vld [vmem:[%s0 + $0x10] sm:$0xff]
    %v31 = vld [vmem:[%s0 + $0x18] sm:$0xff]
    %v32 = vld [vmem:[%s0 + $0x20] sm:$0xff]
    %v33 = vld [vmem:[%s0 + $0x28] sm:$0xff]
    %v34 = vld [vmem:[%s0 + $0x30] sm:$0xff]
    %v35 = vld [vmem:[%s0 + $0x38] sm:$0xff]
    %v36 = vld [vmem:[%s0 + $0x40] sm:$0xff]
    %v37 = vld [vmem:[%s0 + $0x48] sm:$0xff]
    %v38 = vld [vmem:[%s0 + $0x50] sm:$0xff]
    %v39 = vld [vmem:[%s0 + $0x58] sm:$0xff]
    %v40 = vld [vmem:[%s0 + $0x60] sm:$0xff]
    %v41 = vld [vmem:[%s0 + $0x68] sm:$0xff]
    %v42 = vld [vmem:[%s0 + $0x70] sm:$0xff]
    %v43 = vld [vmem:[%s0 + $0x78] sm:$0xff]
    %v44 = vpack.c.bf16 %v29, %v28
    %v45 = vpack.c.bf16 %v31, %v30
    %v46 = vpack.c.bf16 %v33, %v32
    %v47 = vpack.c.bf16 %v35, %v34
    %v48 = vpack.c.bf16 %v37, %v36
    %v49 = vpack.c.bf16 %v39, %v38
    %v50 = vpack.c.bf16 %v41, %v40
    %v51 = vpack.c.bf16 %v43, %v42
    %v52 = vld [vmem:[%s1] sm:$0xf]
    %v53 = vld [vmem:[%s1 + $0x4] sm:$0xf]
    %v54 = vld [vmem:[%s1 + $0x8] sm:$0xf]
    %v55 = vld [vmem:[%s1 + $0xc] sm:$0xf]
    %v56 = vld [vmem:[%s2] sm:$0xff]
    %v57 = vld [vmem:[%s2 + $0x8] sm:$0xff]
    %v58 = vld [vmem:[%s2 + $0x10] sm:$0xff]
    %v59 = vld [vmem:[%s2 + $0x18] sm:$0xff]
    %61 = vset.pattern.permute.xlu0 0
    %62 = vperm.xlu0 %61, %v56
    %v63 = vpop.permute.xlu0 %62
    %66 = vset.pattern.permute.xlu0 0
    %67 = vperm.xlu0 %66, %v57
    %v68 = vpop.permute.xlu0 %67
    %71 = vset.pattern.permute.xlu0 0
    %72 = vperm.xlu0 %71, %v58
    %v73 = vpop.permute.xlu0 %72
    %76 = vset.pattern.permute.xlu0 0
    %77 = vperm.xlu0 %76, %v59
    %v78 = vpop.permute.xlu0 %77
    %v84 = vunpack.c.l.b16 %v52
    %v85 = vunpack.c.l.b16 %v53
    %v86 = vunpack.c.l.b16 %v54
    %v87 = vunpack.c.l.b16 %v55
    %v88 = vpack.c.b16 %v85, %v84
    %v89 = vpack.c.b16 %v87, %v86
    %vm90 = vcmask 523264
    %v92 = vsel %vm90, %v88, 0
    %v95 = vsel %vm90, %v89, 0
    %v98 = vsel %vm90, %v44, 0
    %v101 = vsel %vm90, %v45, 0
    %v104 = vsel %vm90, %v46, 0
    %v107 = vsel %vm90, %v47, 0
    %v110 = vsel %vm90, %v48, 0
    %v113 = vsel %vm90, %v49, 0
    %v116 = vsel %vm90, %v50, 0
    %v119 = vsel %vm90, %v51, 0
    %121 = vmatprep.subr.bf16.mxu0 0
    %122 = vmatpush1.bf16.xpose.msra.mxu0 %v119
    %123 = vmatprep.subr.bf16.mxu0 0
    %124 = vmatpush1.bf16.xpose.msra.mxu0 %v116
    %125 = vmatprep.subr.bf16.mxu0 0
    %126 = vmatpush1.bf16.xpose.msra.mxu0 %v113
    %127 = vmatprep.subr.bf16.mxu0 0
    %128 = vmatpush1.bf16.xpose.msra.mxu0 %v110
    %129 = vmatprep.subr.bf16.mxu0 0
    %130 = vmatpush1.bf16.xpose.msra.mxu0 %v107
    %131 = vmatprep.subr.bf16.mxu0 0
    %132 = vmatpush1.bf16.xpose.msra.mxu0 %v104
    %133 = vmatprep.subr.bf16.mxu0 0
    %134 = vmatpush1.bf16.xpose.msra.mxu0 %v101
    %135 = vmatprep.subr.bf16.mxu0 0
    %136 = vmatpush1.bf16.xpose.msra.mxu0 %v98
    %137 = vmatprep.subr.bf16.mxu0 0
    %138 = vmatpush2.bf16.xpose.msra.mxu0 0
    %139 = vmatprep.subr.bf16.mxu0 0
    %140 = vmatpush2.bf16.xpose.msra.mxu0 0
    %141 = vmatprep.subr.bf16.mxu0 0
    %142 = vmatpush2.bf16.xpose.msra.mxu0 0
    %143 = vmatprep.subr.bf16.mxu0 0
    %144 = vmatpush2.bf16.xpose.msra.mxu0 0
    %145 = vmatprep.subr.bf16.mxu0 0
    %146 = vmatpush2.bf16.xpose.msra.mxu0 0
    %147 = vmatprep.subr.bf16.mxu0 0
    %148 = vmatpush2.bf16.xpose.msra.mxu0 0
    %149 = vmatprep.subr.bf16.mxu0 0
    %150 = vmatpush2.bf16.xpose.msra.mxu0 0
    %151 = vmatprep.subr.bf16.mxu0 0
    %152 = vmatpush2.bf16.xpose.msra.mxu0 0
    %153 = vmatprep.mubr.bf16.mxu0 0
    %154 = vmatmul.mubr.bf16.gmra.mxu0 %v92
    %v155 = vpop.f32.mrf.mxu0
    %v156 = vadd.f32 %v63, %v155
    %v157 = vpop.f32.mrf.mxu0
    %v158 = vpop.f32.mrf.mxu0
    %v159 = vadd.f32 %v68, %v158
    %v160 = vpop.f32.mrf.mxu0
    %161 = vmatprep.mubr.bf16.mxu0 0
    %162 = vmatmul.mubr.bf16.gmra.mxu0 %v95
    %v163 = vpop.f32.mrf.mxu0
    %v164 = vadd.f32 %v73, %v163
    %v165 = vpop.f32.mrf.mxu0
    %v166 = vpop.f32.mrf.mxu0
    %v167 = vadd.f32 %v78, %v166
    %v168 = vpop.f32.mrf.mxu0
    %169 = vdwg.mxu0
    %v170 = vtanh.pop %v156
    %v171 = vtanh.pop %v159
    %v172 = vtanh.pop %v164
    %v173 = vtanh.pop %v167
    %v174 = vpack.c.bf16 %v171, %v170
    %v175 = vpack.c.bf16 %v173, %v172
    %v176 = vld [vmem:[%s3] sm:$0xf]
    %v177 = vld [vmem:[%s3 + $0x4] sm:$0xf]
    %v178 = vld [vmem:[%s3 + $0x8] sm:$0xf]
    %v179 = vld [vmem:[%s3 + $0xc] sm:$0xf]
    %v180 = vld [vmem:[%s4] sm:$0xff]
    %v181 = vld [vmem:[%s4 + $0x8] sm:$0xff]
    %v182 = vld [vmem:[%s4 + $0x10] sm:$0xff]
    %v183 = vld [vmem:[%s4 + $0x18] sm:$0xff]
    %185 = vset.pattern.permute.xlu0 0
    %186 = vperm.xlu0 %185, %v180
    %v187 = vpop.permute.xlu0 %186
    %190 = vset.pattern.permute.xlu0 0
    %191 = vperm.xlu0 %190, %v181
    %v192 = vpop.permute.xlu0 %191
    %195 = vset.pattern.permute.xlu0 0
    %196 = vperm.xlu0 %195, %v182
    %v197 = vpop.permute.xlu0 %196
    %200 = vset.pattern.permute.xlu0 0
    %201 = vperm.xlu0 %200, %v183
    %v202 = vpop.permute.xlu0 %201
    %v208 = vunpack.c.l.b16 %v176
    %v209 = vunpack.c.l.b16 %v177
    %v210 = vunpack.c.l.b16 %v178
    %v211 = vunpack.c.l.b16 %v179
    %v212 = vpack.c.b16 %v209, %v208
    %v213 = vpack.c.b16 %v211, %v210
    %vm214 = vcmask 261120
    %v216 = vsel %vm214, %v212, 0
    %v219 = vsel %vm214, %v213, 0
    %221 = vmatprep.subr.bf16.mxu0 0
    %222 = vmatpush1.bf16.msra.mxu0 0
    %223 = vmatprep.subr.bf16.mxu0 0
    %224 = vmatpush1.bf16.msra.mxu0 0
    %225 = vmatprep.subr.bf16.mxu0 0
    %226 = vmatpush1.bf16.msra.mxu0 0
    %227 = vmatprep.subr.bf16.mxu0 0
    %228 = vmatpush1.bf16.msra.mxu0 0
    %229 = vmatprep.subr.bf16.mxu0 0
    %230 = vmatpush1.bf16.msra.mxu0 0
    %231 = vmatprep.subr.bf16.mxu0 0
    %232 = vmatpush1.bf16.msra.mxu0 0
    %233 = vmatprep.subr.bf16.mxu0 0
    %234 = vmatpush1.bf16.msra.mxu0 %v175
    %235 = vmatprep.subr.bf16.mxu0 0
    %236 = vmatpush1.bf16.msra.mxu0 %v174
    %237 = vmatprep.subr.bf16.mxu0 0
    %238 = vmatpush2.bf16.msra.mxu0 0
    %239 = vmatprep.subr.bf16.mxu0 0
    %240 = vmatpush2.bf16.msra.mxu0 0
    %241 = vmatprep.subr.bf16.mxu0 0
    %242 = vmatpush2.bf16.msra.mxu0 0
    %243 = vmatprep.subr.bf16.mxu0 0
    %244 = vmatpush2.bf16.msra.mxu0 0
    %245 = vmatprep.subr.bf16.mxu0 0
    %246 = vmatpush2.bf16.msra.mxu0 0
    %247 = vmatprep.subr.bf16.mxu0 0
    %248 = vmatpush2.bf16.msra.mxu0 0
    %249 = vmatprep.subr.bf16.mxu0 0
    %250 = vmatpush2.bf16.msra.mxu0 0
    %251 = vmatprep.subr.bf16.mxu0 0
    %252 = vmatpush2.bf16.msra.mxu0 0
    %253 = vmatprep.mubr.bf16.mxu0 0
    %254 = vmatmul.mubr.bf16.gmra.mxu0 %v216
    %v255 = vpop.f32.mrf.mxu0
    %v256 = vadd.f32 %v187, %v255
    %v257 = vpop.f32.mrf.mxu0
    %v258 = vpop.f32.mrf.mxu0
    %v259 = vadd.f32 %v192, %v258
    %v260 = vpop.f32.mrf.mxu0
    %261 = vmatprep.mubr.bf16.mxu0 0
    %262 = vmatmul.mubr.bf16.gmra.mxu0 %v219
    %v263 = vpop.f32.mrf.mxu0
    %v264 = vadd.f32 %v197, %v263
    %v265 = vpop.f32.mrf.mxu0
    %v266 = vpop.f32.mrf.mxu0
    %v267 = vadd.f32 %v202, %v266
    %v268 = vpop.f32.mrf.mxu0
    %269 = vdwg.mxu0
    %v270 = vtanh.pop %v256
    %v271 = vtanh.pop %v259
    %v272 = vtanh.pop %v264
    %v273 = vtanh.pop %v267
    %v274 = vpack.c.bf16 %v271, %v270
    %v275 = vpack.c.bf16 %v273, %v272
    %v276 = vld [vmem:[%s5] sm:$0x7]
    %v277 = vld [vmem:[%s6] sm:$0x3f]
    %279 = vset.pattern.permute.xlu0 0
    %280 = vperm.xlu0 %279, %v277
    %v281 = vpop.permute.xlu0 %280
    %v284 = vsel %vm214, %v276, 0
    %286 = vmatprep.subr.bf16.mxu0 0
    %287 = vmatpush1.bf16.msra.mxu0 0
    %288 = vmatprep.subr.bf16.mxu0 0
    %289 = vmatpush1.bf16.msra.mxu0 0
    %290 = vmatprep.subr.bf16.mxu0 0
    %291 = vmatpush1.bf16.msra.mxu0 0
    %292 = vmatprep.subr.bf16.mxu0 0
    %293 = vmatpush1.bf16.msra.mxu0 0
    %294 = vmatprep.subr.bf16.mxu0 0
    %295 = vmatpush1.bf16.msra.mxu0 0
    %296 = vmatprep.subr.bf16.mxu0 0
    %297 = vmatpush1.bf16.msra.mxu0 0
    %298 = vmatprep.subr.bf16.mxu0 0
    %299 = vmatpush1.bf16.msra.mxu0 %v275
    %300 = vmatprep.subr.bf16.mxu0 0
    %301 = vmatpush1.bf16.msra.mxu0 %v274
    %302 = vmatprep.subr.bf16.mxu0 0
    %303 = vmatpush2.bf16.msra.mxu0 0
    %304 = vmatprep.subr.bf16.mxu0 0
    %305 = vmatpush2.bf16.msra.mxu0 0
    %306 = vmatprep.subr.bf16.mxu0 0
    %307 = vmatpush2.bf16.msra.mxu0 0
    %308 = vmatprep.subr.bf16.mxu0 0
    %309 = vmatpush2.bf16.msra.mxu0 0
    %310 = vmatprep.subr.bf16.mxu0 0
    %311 = vmatpush2.bf16.msra.mxu0 0
    %312 = vmatprep.subr.bf16.mxu0 0
    %313 = vmatpush2.bf16.msra.mxu0 0
    %314 = vmatprep.subr.bf16.mxu0 0
    %315 = vmatpush2.bf16.msra.mxu0 0
    %316 = vmatprep.subr.bf16.mxu0 0
    %317 = vmatpush2.bf16.msra.mxu0 0
    %318 = vmatprep.mubr.bf16.mxu0 0
    %319 = vmatmul.mubr.bf16.gmra.mxu0 %v284
    %v320 = vpop.f32.mrf.mxu0
    %v321 = vadd.f32 %v281, %v320
    %v322 = vpop.f32.mrf.mxu0
    %v323 = vpop.f32.mrf.mxu0
    %v324 = vpop.f32.mrf.mxu0
    %325 = vdwg.mxu0
    %vm326 = vcmask 1045504
    %v327 = vsel %vm326, %v321, -inf
    %v328 = vrot.slane %v327, 4
    %v329 = vmax.f32 %v327, %v328
    %v330 = vrot.slane %v329, 2
    %v331 = vmax.f32 %v329, %v330
    %v332 = vrot.slane %v331, 1
    %v333 = vmax.f32 %v331, %v332
    %v334 = vsub.f32 %v321, %v333
    %v335 = vmul.f32 %v334, 1.442695
    %v336 = vpow.pop %v335
    %v337 = vsel %vm326, %v336, 0.0
    %v338 = vrot.slane %v337, 4
    %v339 = vadd.f32 %v337, %v338
    %v340 = vrot.slane %v339, 2
    %v341 = vadd.f32 %v339, %v340
    %v342 = vrot.slane %v341, 1
    %v343 = vadd.f32 %v341, %v342
    %v344 = vrcp.pop %v343
    %v345 = vmul.f32 %v336, %v344
    %346 = vst [vmem:[#allocation2] sm:$0x3f] %v345
    // Predicated region
    $region30: #{tpu_custom_call.1} parent=1 // pred_check
      _
    $region31: #{tpu_custom_call.1} parent=1 // pred_check_branch
      %348 = sbr.rel (0) target = $region33
    $region32: #{tpu_custom_call.1} parent=1 // pred_region
      %s350 = ssub.s32 128, 128
      %351 = vsyncadd [#allocation3], %s350
      %s353 = sshll.u32 [#allocation2], 4
      %s354 = int_to_ptr.vmem [resolvable:$true] %s353
      %356 = dma.vmem_to_hbm [thread:$0]  %s354, 128, %s7, [#allocation3]
    $region33: #{tpu_custom_call.1} parent=1 // pred_fallthru
      _
    // Predicated region
    $region34: #{tpu_custom_call.1} parent=1 // pred_check
      _
    $region35: #{tpu_custom_call.1} parent=1 // pred_check_branch
      %358 = sbr.rel (0) target = $region37
    $region36: #{tpu_custom_call.1} parent=1 // pred_region
      %359 = dma.done [#allocation3], 128
    $region37: #{tpu_custom_call.1} parent=1 // pred_fallthru
      _
    %360 = vsyncpa [#allocation3], 1

</llo_original>
